<compile_context>
chip_gen: v6e
topology: v6e:2x2x1
jax: 0.10.0
libtpu: 0.0.40
codegen_flags: <defaults>
</compile_context>

<pallas_src>
import functools

import jax
import jax.numpy as jnp
from jax.experimental import pallas as pl
from jax.experimental.pallas import tpu as pltpu


_SUB = 256  # in-kernel compute sub-chunk (rows); bounds live vreg ranges


def _round_up(x, m):
    return pl.cdiv(x, m) * m


def _vmem_capacity_bytes():
    try:
        return int(pltpu.get_tpu_info().vmem_capacity_bytes)
    except Exception:
        return 64 * 1024 * 1024  # conservative (v7x-sized) fallback


def _choose_tiling(n_total, dim, cp, tile_n_req):
    """Generation-aware row-tile / sub-chunk / vmem-limit selection."""
    cap = _vmem_capacity_bytes()
    if cap >= 96 * 1024 * 1024:          # 128-MiB VMEM chips (v5e / v6e)
        budget = 64 * 1024 * 1024
        vmem_limit = 96 * 1024 * 1024
    else:                                 # 64-MiB VMEM (v7x) or unknown
        budget = 24 * 1024 * 1024
        vmem_limit = 48 * 1024 * 1024

    weight_bytes = 2 * dim * 3 * cp * 2           # double-buffered bf16 weight
    interm_bytes = _SUB * 3 * cp * 4 * 8          # live temps of one sub-chunk
    fixed = weight_bytes + interm_bytes + 3 * 8 * cp * 4 + (1 << 20)
    per_row = 2 * (dim * 4 + 2 * 4)               # dbl-buffered feats + 2 idx
    avail = max(budget - fixed, per_row * 8)
    tile_cap = max(8, avail // per_row)

    tile_n = max(8, min(int(tile_n_req), int(tile_cap)))
    if tile_n >= _SUB:
        tile_n = (tile_n // _SUB) * _SUB
    else:
        tile_n = (tile_n // 8) * 8

    if n_total <= tile_n:                         # single-tile fast path
        tile_n = _round_up(n_total, 8)
        if tile_n > _SUB:
            tile_n = _round_up(tile_n, _SUB)
    sub = min(_SUB, tile_n)
    return tile_n, sub, vmem_limit


def _tpn_kernel(feats_ref, si_ref, ti_ref, u_ref, bias_ref, out_ref,
                acc_kl, acc_ces, acc_cet,
                *, n_total, n_src, n_trg, n_cls, cp, sub):
    i = pl.program_id(0)

    @pl.when(i == 0)
    def _init():
        acc_kl[...] = jnp.zeros_like(acc_kl)
        acc_ces[...] = jnp.zeros_like(acc_ces)
        acc_cet[...] = jnp.zeros_like(acc_cet)

    u = u_ref[...]        # (D, 3*CP) bf16, MXU-native (K, N), grid-invariant
    bias = bias_ref[...]  # (1, 3*CP): 0 for real classes, -1e30 for padding
    col = jax.lax.broadcasted_iota(jnp.int32, (sub, cp), 1)

    def process(x_rows, s_idx, t_idx):
        # Single fused, single-pass bf16 matmul for all three center sets.
        x = x_rows.astype(jnp.bfloat16)                     # (sub, D)
        p_all = jax.lax.dot_general(
            x, u, (((1,), (0,)), ((), ())),
            preferred_element_type=jnp.float32) + bias      # (sub, 3*CP)

        def softmax_pair(p):
            m = jnp.max(p, axis=-1, keepdims=True)
            e = jnp.exp(p - m)                              # exp computed once
            s = jnp.sum(e, axis=-1, keepdims=True)
            lsm = (p - m) - jnp.log(s)                      # log-softmax
            sm = e * pl.reciprocal(s, approx=True)          # softmax (EUP rcp)
            return sm, lsm

        sm_s, lsm_s = softmax_pair(p_all[:, 0 * cp:1 * cp])
        sm_t, lsm_t = softmax_pair(p_all[:, 1 * cp:2 * cp])
        sm_u, lsm_u = softmax_pair(p_all[:, 2 * cp:3 * cp])

        # Symmetric KL, all three pairs share one accumulator (same divisor).
        kl = ((sm_s - sm_t) * (lsm_s - lsm_t)
              + (sm_s - sm_u) * (lsm_s - lsm_u)
              + (sm_t - sm_u) * (lsm_t - lsm_u))

        # Cross-entropy from int32 class indices (-1 sentinel never matches).
        ce_s = jnp.where(col == s_idx, -lsm_s, jnp.float32(0.0))
        ce_t = jnp.where(col == t_idx, -lsm_t, jnp.float32(0.0))

        # Fold (sub, CP) -> (8, CP) with pure vreg adds (VPU); the 8->1
        # sublane (XLU) reduce is deferred to the final grid step.
        def fold8(v):
            return jnp.sum(v.reshape(sub // 8, 8, cp), axis=0)

        acc_kl[...] += fold8(kl)
        acc_ces[...] += fold8(ce_s)
        acc_cet[...] += fold8(ce_t)

    n_sub = feats_ref.shape[0] // sub
    if n_sub == 1:
        process(feats_ref[...], si_ref[...], ti_ref[...])
    else:
        # Sub-chunk the row tile to bound live vreg ranges (v5e spill relief)
        # while keeping the DMA block at the full tile size.
        @pl.loop(0, n_sub)
        def _chunks(c):
            base = pl.multiple_of(c * sub, sub)
            process(feats_ref[pl.ds(base, sub), :],
                    si_ref[pl.ds(base, sub), :],
                    ti_ref[pl.ds(base, sub), :])

    @pl.when(i == pl.num_programs(0) - 1)
    def _finalize():
        def tot(ref):                       # full reduce, kept as (1, 1)
            return jnp.sum(ref[...], axis=(0, 1), keepdims=True)

        loss_tpn = tot(acc_kl) / jnp.float32(2.0 * 3.0 * n_total * n_cls)
        loss_ces = tot(acc_ces) / jnp.float32(n_src)
        loss_cet = tot(acc_cet) / jnp.float32(n_trg)

        # Pack the three scalars into one lane-dense (1, 128) output block.
        lane = jax.lax.broadcasted_iota(jnp.int32, (1, 128), 1)
        res = jnp.where(lane == 0, loss_tpn, jnp.float32(0.0))
        res = jnp.where(lane == 1, loss_ces, res)
        res = jnp.where(lane == 2, loss_cet, res)
        out_ref[...] = res


def tpn_task_loss(src_feat, trg_feat, src_label, trg_label, trg_feat_un,
                  num_classes, tile_n=512):
    """Pallas implementation of TpnTaskLoss_Non_Param.forward.

    num_classes must be the (static) number of distinct labels in src_label;
    every class is assumed to appear in both src_label and trg_label (same
    assumption the PyTorch module makes, otherwise it divides by zero).
    Logits use single-pass bf16 MXU matmul with f32 accumulation (the standard
    TPU matmul precision).
    """
    src_feat = src_feat.astype(jnp.float32)
    trg_feat = trg_feat.astype(jnp.float32)
    trg_feat_un = trg_feat_un.astype(jnp.float32)

    ns, dim = src_feat.shape
    nt = trg_feat.shape[0]
    nu = trg_feat_un.shape[0]
    n_total = ns + nt + nu

    cp = max(128, _round_up(num_classes, 128))   # lane-padded class width
    hi = jax.lax.Precision.HIGHEST

    # ----- label-dependent glue (plain JAX): class centers & class indices
    labels = jnp.unique(src_label, size=num_classes)                    # sorted
    oh_s = (src_label[:, None] == labels[None, :]).astype(jnp.float32)  # (ns,C)
    oh_t = (trg_label[:, None] == labels[None, :]).astype(jnp.float32)  # (nt,C)
    sum_s = jnp.matmul(oh_s.T, src_feat, precision=hi)                  # (C, D)
    sum_t = jnp.matmul(oh_t.T, trg_feat, precision=hi)
    cnt_s = oh_s.sum(0)[:, None]
    cnt_t = oh_t.sum(0)[:, None]
    u_s = sum_s / cnt_s
    u_t = sum_t / cnt_t
    u_st = (sum_s + sum_t) / (cnt_s + cnt_t)

    # ----- MMD term: tiny, depends only on the centers -> exact plain JAX
    mse = lambda a, b: jnp.mean((a - b) ** 2)
    mmd_loss = (mse(u_s, u_t) + mse(u_s, u_st) + mse(u_t, u_st)) / jnp.float32(3.0)

    # ----- MXU-native (K, N) bf16 weight: [u_s | u_t | u_st], lane-padded
    u_all = jnp.zeros((dim, 3 * cp), jnp.float32)
    u_all = u_all.at[:, 0:num_classes].set(u_s.T)
    u_all = u_all.at[:, cp:cp + num_classes].set(u_t.T)
    u_all = u_all.at[:, 2 * cp:2 * cp + num_classes].set(u_st.T)
    u_all = u_all.astype(jnp.bfloat16)

    # Additive column mask (0 for real classes, -1e30 for lane padding).
    col3 = jnp.arange(3 * cp, dtype=jnp.int32) % cp
    bias = jnp.where(col3 < num_classes, 0.0, -1e30).astype(jnp.float32)[None, :]

    feats = jnp.concatenate([src_feat, trg_feat, trg_feat_un], axis=0)

    # Per-row class indices (int32), -1 sentinel where the CE term is absent.
    src_idx = jnp.searchsorted(labels, src_label).astype(jnp.int32)
    trg_idx = jnp.searchsorted(labels, trg_label).astype(jnp.int32)

    tile_rows, sub, vmem_limit = _choose_tiling(n_total, dim, cp, tile_n)
    n_pad = _round_up(n_total, tile_rows)

    feats_p = jnp.pad(feats, ((0, n_pad - n_total), (0, 0)))
    si = jnp.full((n_pad, 1), -1, jnp.int32).at[:ns, 0].set(src_idx)
    ti = jnp.full((n_pad, 1), -1, jnp.int32).at[ns:ns + nt, 0].set(trg_idx)

    kernel = functools.partial(
        _tpn_kernel, n_total=n_total, n_src=ns, n_trg=nt,
        n_cls=num_classes, cp=cp, sub=sub)

    out = pl.pallas_call(
        kernel,
        out_shape=jax.ShapeDtypeStruct((1, 128), jnp.float32),
        grid_spec=pltpu.PrefetchScalarGridSpec(
            num_scalar_prefetch=0,
            grid=(n_pad // tile_rows,),
            in_specs=[
                pl.BlockSpec((tile_rows, dim), lambda i: (i, 0)),   # feats f32
                pl.BlockSpec((tile_rows, 1), lambda i: (i, 0)),     # src idx
                pl.BlockSpec((tile_rows, 1), lambda i: (i, 0)),     # trg idx
                pl.BlockSpec((dim, 3 * cp), lambda i: (0, 0)),      # bf16 (K,N)
                pl.BlockSpec((1, 3 * cp), lambda i: (0, 0)),        # col bias
            ],
            out_specs=pl.BlockSpec((1, 128), lambda i: (0, 0)),
            scratch_shapes=[pltpu.VMEM((8, cp), jnp.float32)] * 3,
        ),
        compiler_params=pltpu.CompilerParams(
            dimension_semantics=("arbitrary",),
            vmem_limit_bytes=vmem_limit),
    )(feats_p, si, ti, u_all, bias)

    return out[0, 0], out[0, 1], out[0, 2], mmd_loss


# ----------------------------- pure-JAX reference ---------------------------
def reference_tpn(src_feat, trg_feat, src_label, trg_label, trg_feat_un,
                  num_classes):
    hi = jax.lax.Precision.HIGHEST
    labels = jnp.unique(src_label, size=num_classes)
    oh_s = (src_label[:, None] == labels[None, :]).astype(jnp.float32)
    oh_t = (trg_label[:, None] == labels[None, :]).astype(jnp.float32)
    sum_s = jnp.matmul(oh_s.T, src_feat, precision=hi)
    sum_t = jnp.matmul(oh_t.T, trg_feat, precision=hi)
    cnt_s = oh_s.sum(0)[:, None]
    cnt_t = oh_t.sum(0)[:, None]
    u_s = sum_s / cnt_s
    u_t = sum_t / cnt_t
    u_st = (sum_s + sum_t) / (cnt_s + cnt_t)

    mse = lambda a, b: jnp.mean((a - b) ** 2)
    mmd_loss = (mse(u_s, u_t) + mse(u_s, u_st) + mse(u_t, u_st)) / 3.0

    feats = jnp.concatenate([src_feat, trg_feat, trg_feat_un], axis=0)

    # Mirror the kernel's logit precision (bf16 operands, f32 accumulate) so
    # the check isolates kernel plumbing rather than MXU precision policy.
    def logits(u):
        return jnp.matmul(feats.astype(jnp.bfloat16), u.T.astype(jnp.bfloat16),
                          preferred_element_type=jnp.float32)

    P_s, P_t, P_st = logits(u_s), logits(u_t), logits(u_st)

    ns = src_feat.shape[0]
    nt = trg_feat.shape[0]
    src_idx = jnp.searchsorted(labels, src_label)
    trg_idx = jnp.searchsorted(labels, trg_label)

    def ce(lg, idx):
        lsm = jax.nn.log_softmax(lg, axis=-1)
        return -jnp.mean(jnp.take_along_axis(lsm, idx[:, None], axis=1))

    loss_supv_s = ce(P_s[:ns], src_idx)
    loss_supv_t = ce(P_t[ns:ns + nt], trg_idx)

    def sym_kl(a, b):
        la = jax.nn.log_softmax(a, -1)
        lb = jax.nn.log_softmax(b, -1)
        pa, pb = jnp.exp(la), jnp.exp(lb)
        # F.kl_div(log_softmax(a), softmax(b), reduction='elementwise_mean')
        return (jnp.mean(pb * (lb - la)) + jnp.mean(pa * (la - lb))) / 2.0

    loss_tpn = (sym_kl(P_s, P_t) + sym_kl(P_s, P_st) + sym_kl(P_t, P_st)) / 3.0
    return loss_tpn, loss_supv_s, loss_supv_t, mmd_loss


def _run_case(key, C, dim, ns, nt, nu, tile_n):
    k1, k2, k3 = jax.random.split(key, 3)
    src_feat = jax.random.normal(k1, (ns, dim), jnp.float32)
    trg_feat = jax.random.normal(k2, (nt, dim), jnp.float32) + 0.5
    trg_feat_un = jax.random.normal(k3, (nu, dim), jnp.float32)
    # Deterministic labels guaranteeing every class appears in src and trg.
    src_label = jnp.tile(jnp.arange(C, dtype=jnp.int32), ns // C)
    trg_label = jnp.tile(jnp.arange(C, dtype=jnp.int32), nt // C)

    out = tpn_task_loss(src_feat, trg_feat, src_label, trg_label,
                        trg_feat_un, num_classes=C, tile_n=tile_n)
    out = jax.block_until_ready(out)

    ref = reference_tpn(src_feat, trg_feat, src_label, trg_label,
                        trg_feat_un, num_classes=C)
    names = ("loss_tpn", "loss_supv_s", "loss_supv_t", "mmd")
    for n, o, r in zip(names, out, ref):
        assert jnp.allclose(o, r, rtol=2e-2, atol=1e-3), (n, float(o), float(r))


if __name__ == "__main__":
    key = jax.random.PRNGKey(0)
    k_a, k_b, k_c = jax.random.split(key, 3)

    # Single-tile fast path (small problem, one sub-chunk).
    _run_case(k_a, C=4, dim=32, ns=16, nt=16, nu=24, tile_n=512)
    # Multi-tile grid path: small row tile to exercise cross-step accumulation.
    _run_case(k_b, C=6, dim=64, ns=48, nt=48, nu=160, tile_n=64)
    # Single tile, two in-kernel 256-row sub-chunks (pl.loop path).
    _run_case(k_c, C=8, dim=128, ns=64, nt=64, nu=384, tile_n=512)

    print("KERNEL_OK")
</pallas_src>

<mosaic_0001>
module attributes {stable_mosaic.version = 11 : i64} {
  func.func @_tpn_kernel(%arg0: i32, %arg1: memref<56x32xf32, #tpu.memory_space<vmem>>, %arg2: memref<56x1xi32, #tpu.memory_space<vmem>>, %arg3: memref<56x1xi32, #tpu.memory_space<vmem>>, %arg4: memref<32x384xbf16, #tpu.memory_space<vmem>>, %arg5: memref<1x384xf32, #tpu.memory_space<vmem>>, %arg6: memref<1x128xf32, #tpu.memory_space<vmem>>, %arg7: memref<8x128xf32, #tpu.memory_space<vmem>>, %arg8: memref<8x128xf32, #tpu.memory_space<vmem>>, %arg9: memref<8x128xf32, #tpu.memory_space<vmem>>) attributes {dimension_semantics = [#tpu.dimension_semantics<arbitrary>], iteration_bounds = array<i64: 1>, scalar_prefetch = 0 : i64, scratch_operands = 3 : i64, tpu.core_type = #tpu.core_type<tc>, window_params = [{transform_indices = @transform_0, window_bounds = array<i64: 56, 32>}, {transform_indices = @transform_1, window_bounds = array<i64: 56, 1>}, {transform_indices = @transform_2, window_bounds = array<i64: 56, 1>}, {pipeline_mode = #tpu.pipeline_mode<synchronous>, transform_indices = @transform_3, window_bounds = array<i64: 32, 384>}, {pipeline_mode = #tpu.pipeline_mode<synchronous>, transform_indices = @transform_4, window_bounds = array<i64: 1, 384>}, {pipeline_mode = #tpu.pipeline_mode<synchronous>, transform_indices = @transform_5, window_bounds = array<i64: 1, 128>}]} {
    %c0_i32 = arith.constant 0 : i32
    %0 = arith.cmpi eq, %arg0, %c0_i32 : i32
    %1 = arith.extui %0 : i1 to i32
    %c0_i32_0 = arith.constant 0 : i32
    %2 = arith.cmpi ne, %1, %c0_i32_0 : i32
    scf.if %2 {
      %cst_37 = arith.constant 0.000000e+00 : f32
      %102 = vector.broadcast %cst_37 : f32 to vector<8x128xf32>
      %c0_38 = arith.constant 0 : index
      %c0_39 = arith.constant 0 : index
      %103 = vector.load %arg7[%c0_38, %c0_39] : memref<8x128xf32, #tpu.memory_space<vmem>>, vector<8x128xf32>
      tpu.vector_store %arg7[%c0_38, %c0_39], %102 {strides = array<i32>} : memref<8x128xf32, #tpu.memory_space<vmem>>, vector<8x128xf32>,
      %cst_40 = arith.constant 0.000000e+00 : f32
      %104 = vector.broadcast %cst_40 : f32 to vector<8x128xf32>
      %c0_41 = arith.constant 0 : index
      %c0_42 = arith.constant 0 : index
      %105 = vector.load %arg8[%c0_41, %c0_42] : memref<8x128xf32, #tpu.memory_space<vmem>>, vector<8x128xf32>
      tpu.vector_store %arg8[%c0_41, %c0_42], %104 {strides = array<i32>} : memref<8x128xf32, #tpu.memory_space<vmem>>, vector<8x128xf32>,
      %cst_43 = arith.constant 0.000000e+00 : f32
      %106 = vector.broadcast %cst_43 : f32 to vector<8x128xf32>
      %c0_44 = arith.constant 0 : index
      %c0_45 = arith.constant 0 : index
      %107 = vector.load %arg9[%c0_44, %c0_45] : memref<8x128xf32, #tpu.memory_space<vmem>>, vector<8x128xf32>
      tpu.vector_store %arg9[%c0_44, %c0_45], %106 {strides = array<i32>} : memref<8x128xf32, #tpu.memory_space<vmem>>, vector<8x128xf32>,
    } else {
    }
    %c0 = arith.constant 0 : index
    %c0_1 = arith.constant 0 : index
    %3 = vector.load %arg4[%c0, %c0_1] : memref<32x384xbf16, #tpu.memory_space<vmem>>, vector<32x384xbf16>
    %c0_2 = arith.constant 0 : index
    %c0_3 = arith.constant 0 : index
    %4 = vector.load %arg5[%c0_2, %c0_3] : memref<1x384xf32, #tpu.memory_space<vmem>>, vector<1x384xf32>
    %5 = tpu.iota {dimensions = array<i32: 1>} : vector<56x128xi32>
    %c0_4 = arith.constant 0 : index
    %c0_5 = arith.constant 0 : index
    %6 = vector.load %arg1[%c0_4, %c0_5] : memref<56x32xf32, #tpu.memory_space<vmem>>, vector<56x32xf32>
    %c0_6 = arith.constant 0 : index
    %c0_7 = arith.constant 0 : index
    %7 = vector.load %arg2[%c0_6, %c0_7] : memref<56x1xi32, #tpu.memory_space<vmem>>, vector<56x1xi32>
    %c0_8 = arith.constant 0 : index
    %c0_9 = arith.constant 0 : index
    %8 = vector.load %arg3[%c0_8, %c0_9] : memref<56x1xi32, #tpu.memory_space<vmem>>, vector<56x1xi32>
    %9 = arith.truncf %6 : vector<56x32xf32> to vector<56x32xbf16>
    %cst = arith.constant dense<0.000000e+00> : vector<56x384xf32>
    %10 = tpu.matmul %9, %3, %cst {dimension_numbers = #tpu.dot_dimension_numbers<[1], [0], [0], [1], [0, 0, 1, 1], [], []>} : vector<56x32xbf16>, vector<32x384xbf16>, vector<56x384xf32> -> vector<56x384xf32>
    %11 = vector.broadcast %4 : vector<1x384xf32> to vector<56x384xf32>
    %12 = arith.addf %10, %11 : vector<56x384xf32>
    %13 = vector.extract_strided_slice %12 {offsets = [0, 0], sizes = [56, 128], strides = [1, 1]} : vector<56x384xf32> to vector<56x128xf32>
    %cst_10 = arith.constant dense<0xFF800000> : vector<56xf32>
    %14 = vector.multi_reduction <maximumf>, %13, %cst_10 [1] : vector<56x128xf32> to vector<56xf32>
    %15 = vector.shape_cast %14 : vector<56xf32> to vector<56x1xf32>
    %16 = vector.broadcast %15 : vector<56x1xf32> to vector<56x128xf32>
    %17 = arith.subf %13, %16 : vector<56x128xf32>
    %18 = math.exp %17 : vector<56x128xf32>
    %cst_11 = arith.constant dense<0.000000e+00> : vector<56xf32>
    %19 = vector.multi_reduction <add>, %18, %cst_11 [1] : vector<56x128xf32> to vector<56xf32>
    %20 = vector.shape_cast %19 : vector<56xf32> to vector<56x1xf32>
    %21 = vector.broadcast %15 : vector<56x1xf32> to vector<56x128xf32>
    %22 = arith.subf %13, %21 : vector<56x128xf32>
    %23 = math.log %20 : vector<56x1xf32>
    %24 = vector.broadcast %23 : vector<56x1xf32> to vector<56x128xf32>
    %25 = arith.subf %22, %24 : vector<56x128xf32>
    %26 = tpu.reciprocal %20 {approx = true} : vector<56x1xf32> -> vector<56x1xf32>
    %27 = vector.broadcast %26 : vector<56x1xf32> to vector<56x128xf32>
    %28 = arith.mulf %18, %27 : vector<56x128xf32>
    %29 = vector.extract_strided_slice %12 {offsets = [0, 128], sizes = [56, 128], strides = [1, 1]} : vector<56x384xf32> to vector<56x128xf32>
    %cst_12 = arith.constant dense<0xFF800000> : vector<56xf32>
    %30 = vector.multi_reduction <maximumf>, %29, %cst_12 [1] : vector<56x128xf32> to vector<56xf32>
    %31 = vector.shape_cast %30 : vector<56xf32> to vector<56x1xf32>
    %32 = vector.broadcast %31 : vector<56x1xf32> to vector<56x128xf32>
    %33 = arith.subf %29, %32 : vector<56x128xf32>
    %34 = math.exp %33 : vector<56x128xf32>
    %cst_13 = arith.constant dense<0.000000e+00> : vector<56xf32>
    %35 = vector.multi_reduction <add>, %34, %cst_13 [1] : vector<56x128xf32> to vector<56xf32>
    %36 = vector.shape_cast %35 : vector<56xf32> to vector<56x1xf32>
    %37 = vector.broadcast %31 : vector<56x1xf32> to vector<56x128xf32>
    %38 = arith.subf %29, %37 : vector<56x128xf32>
    %39 = math.log %36 : vector<56x1xf32>
    %40 = vector.broadcast %39 : vector<56x1xf32> to vector<56x128xf32>
    %41 = arith.subf %38, %40 : vector<56x128xf32>
    %42 = tpu.reciprocal %36 {approx = true} : vector<56x1xf32> -> vector<56x1xf32>
    %43 = vector.broadcast %42 : vector<56x1xf32> to vector<56x128xf32>
    %44 = arith.mulf %34, %43 : vector<56x128xf32>
    %45 = vector.extract_strided_slice %12 {offsets = [0, 256], sizes = [56, 128], strides = [1, 1]} : vector<56x384xf32> to vector<56x128xf32>
    %cst_14 = arith.constant dense<0xFF800000> : vector<56xf32>
    %46 = vector.multi_reduction <maximumf>, %45, %cst_14 [1] : vector<56x128xf32> to vector<56xf32>
    %47 = vector.shape_cast %46 : vector<56xf32> to vector<56x1xf32>
    %48 = vector.broadcast %47 : vector<56x1xf32> to vector<56x128xf32>
    %49 = arith.subf %45, %48 : vector<56x128xf32>
    %50 = math.exp %49 : vector<56x128xf32>
    %cst_15 = arith.constant dense<0.000000e+00> : vector<56xf32>
    %51 = vector.multi_reduction <add>, %50, %cst_15 [1] : vector<56x128xf32> to vector<56xf32>
    %52 = vector.shape_cast %51 : vector<56xf32> to vector<56x1xf32>
    %53 = vector.broadcast %47 : vector<56x1xf32> to vector<56x128xf32>
    %54 = arith.subf %45, %53 : vector<56x128xf32>
    %55 = math.log %52 : vector<56x1xf32>
    %56 = vector.broadcast %55 : vector<56x1xf32> to vector<56x128xf32>
    %57 = arith.subf %54, %56 : vector<56x128xf32>
    %58 = tpu.reciprocal %52 {approx = true} : vector<56x1xf32> -> vector<56x1xf32>
    %59 = vector.broadcast %58 : vector<56x1xf32> to vector<56x128xf32>
    %60 = arith.mulf %50, %59 : vector<56x128xf32>
    %61 = arith.subf %28, %44 : vector<56x128xf32>
    %62 = arith.subf %25, %41 : vector<56x128xf32>
    %63 = arith.mulf %61, %62 : vector<56x128xf32>
    %64 = arith.subf %28, %60 : vector<56x128xf32>
    %65 = arith.subf %25, %57 : vector<56x128xf32>
    %66 = arith.mulf %64, %65 : vector<56x128xf32>
    %67 = arith.addf %63, %66 : vector<56x128xf32>
    %68 = arith.subf %44, %60 : vector<56x128xf32>
    %69 = arith.subf %41, %57 : vector<56x128xf32>
    %70 = arith.mulf %68, %69 : vector<56x128xf32>
    %71 = arith.addf %67, %70 : vector<56x128xf32>
    %72 = vector.broadcast %7 : vector<56x1xi32> to vector<56x128xi32>
    %73 = arith.cmpi eq, %5, %72 : vector<56x128xi32>
    %cst_16 = arith.constant 0.000000e+00 : f32
    %74 = vector.broadcast %cst_16 : f32 to vector<56x128xf32>
    %75 = arith.subf %74, %25 : vector<56x128xf32>
    %cst_17 = arith.constant 0.000000e+00 : f32
    %76 = vector.broadcast %cst_17 : f32 to vector<56x128xf32>
    %77 = arith.select %73, %75, %76 : vector<56x128xi1>, vector<56x128xf32>
    %78 = vector.broadcast %8 : vector<56x1xi32> to vector<56x128xi32>
    %79 = arith.cmpi eq, %5, %78 : vector<56x128xi32>
    %cst_18 = arith.constant 0.000000e+00 : f32
    %80 = vector.broadcast %cst_18 : f32 to vector<56x128xf32>
    %81 = arith.subf %80, %41 : vector<56x128xf32>
    %cst_19 = arith.constant 0.000000e+00 : f32
    %82 = vector.broadcast %cst_19 : f32 to vector<56x128xf32>
    %83 = arith.select %79, %81, %82 : vector<56x128xi1>, vector<56x128xf32>
    %c0_20 = arith.constant 0 : index
    %c0_21 = arith.constant 0 : index
    %84 = vector.load %arg7[%c0_20, %c0_21] : memref<8x128xf32, #tpu.memory_space<vmem>>, vector<8x128xf32>
    %85 = vector.shape_cast %71 : vector<56x128xf32> to vector<7x8x128xf32>
    %cst_22 = arith.constant dense<0.000000e+00> : vector<8x128xf32>
    %86 = vector.multi_reduction <add>, %85, %cst_22 [0] : vector<7x8x128xf32> to vector<8x128xf32>
    %87 = arith.addf %84, %86 : vector<8x128xf32>
    %c0_23 = arith.constant 0 : index
    %c0_24 = arith.constant 0 : index
    %88 = vector.load %arg7[%c0_23, %c0_24] : memref<8x128xf32, #tpu.memory_space<vmem>>, vector<8x128xf32>
    tpu.vector_store %arg7[%c0_23, %c0_24], %87 {strides = array<i32>} : memref<8x128xf32, #tpu.memory_space<vmem>>, vector<8x128xf32>,
    %c0_25 = arith.constant 0 : index
    %c0_26 = arith.constant 0 : index
    %89 = vector.load %arg8[%c0_25, %c0_26] : memref<8x128xf32, #tpu.memory_space<vmem>>, vector<8x128xf32>
    %90 = vector.shape_cast %77 : vector<56x128xf32> to vector<7x8x128xf32>
    %cst_27 = arith.constant dense<0.000000e+00> : vector<8x128xf32>
    %91 = vector.multi_reduction <add>, %90, %cst_27 [0] : vector<7x8x128xf32> to vector<8x128xf32>
    %92 = arith.addf %89, %91 : vector<8x128xf32>
    %c0_28 = arith.constant 0 : index
    %c0_29 = arith.constant 0 : index
    %93 = vector.load %arg8[%c0_28, %c0_29] : memref<8x128xf32, #tpu.memory_space<vmem>>, vector<8x128xf32>
    tpu.vector_store %arg8[%c0_28, %c0_29], %92 {strides = array<i32>} : memref<8x128xf32, #tpu.memory_space<vmem>>, vector<8x128xf32>,
    %c0_30 = arith.constant 0 : index
    %c0_31 = arith.constant 0 : index
    %94 = vector.load %arg9[%c0_30, %c0_31] : memref<8x128xf32, #tpu.memory_space<vmem>>, vector<8x128xf32>
    %95 = vector.shape_cast %83 : vector<56x128xf32> to vector<7x8x128xf32>
    %cst_32 = arith.constant dense<0.000000e+00> : vector<8x128xf32>
    %96 = vector.multi_reduction <add>, %95, %cst_32 [0] : vector<7x8x128xf32> to vector<8x128xf32>
    %97 = arith.addf %94, %96 : vector<8x128xf32>
    %c0_33 = arith.constant 0 : index
    %c0_34 = arith.constant 0 : index
    %98 = vector.load %arg9[%c0_33, %c0_34] : memref<8x128xf32, #tpu.memory_space<vmem>>, vector<8x128xf32>
    tpu.vector_store %arg9[%c0_33, %c0_34], %97 {strides = array<i32>} : memref<8x128xf32, #tpu.memory_space<vmem>>, vector<8x128xf32>,
    %c0_i32_35 = arith.constant 0 : i32
    %99 = arith.cmpi eq, %arg0, %c0_i32_35 : i32
    %100 = arith.extui %99 : i1 to i32
    %c0_i32_36 = arith.constant 0 : i32
    %101 = arith.cmpi ne, %100, %c0_i32_36 : i32
    scf.if %101 {
      %c0_37 = arith.constant 0 : index
      %c0_38 = arith.constant 0 : index
      %102 = vector.load %arg7[%c0_37, %c0_38] : memref<8x128xf32, #tpu.memory_space<vmem>>, vector<8x128xf32>
      %103 = vector.shape_cast %102 : vector<8x128xf32> to vector<1x8x128xf32>
      %cst_39 = arith.constant dense<0.000000e+00> : vector<1xf32>
      %104 = vector.multi_reduction <add>, %103, %cst_39 [1, 2] : vector<1x8x128xf32> to vector<1xf32>
      %105 = vector.shape_cast %104 : vector<1xf32> to vector<1x1x1xf32>
      %106 = vector.extract %105[0, 0, 0] : f32 from vector<1x1x1xf32>
      %107 = vector.broadcast %106 : f32 to vector<1x1xf32>
      %cst_40 = arith.constant 1.344000e+03 : f32
      %108 = vector.broadcast %cst_40 : f32 to vector<1x1xf32>
      %109 = arith.divf %107, %108 : vector<1x1xf32>
      %c0_41 = arith.constant 0 : index
      %c0_42 = arith.constant 0 : index
      %110 = vector.load %arg8[%c0_41, %c0_42] : memref<8x128xf32, #tpu.memory_space<vmem>>, vector<8x128xf32>
      %111 = vector.shape_cast %110 : vector<8x128xf32> to vector<1x8x128xf32>
      %cst_43 = arith.constant dense<0.000000e+00> : vector<1xf32>
      %112 = vector.multi_reduction <add>, %111, %cst_43 [1, 2] : vector<1x8x128xf32> to vector<1xf32>
      %113 = vector.shape_cast %112 : vector<1xf32> to vector<1x1x1xf32>
      %114 = vector.extract %113[0, 0, 0] : f32 from vector<1x1x1xf32>
      %115 = vector.broadcast %114 : f32 to vector<1x1xf32>
      %cst_44 = arith.constant 1.600000e+01 : f32
      %116 = vector.broadcast %cst_44 : f32 to vector<1x1xf32>
      %117 = arith.divf %115, %116 : vector<1x1xf32>
      %c0_45 = arith.constant 0 : index
      %c0_46 = arith.constant 0 : index
      %118 = vector.load %arg9[%c0_45, %c0_46] : memref<8x128xf32, #tpu.memory_space<vmem>>, vector<8x128xf32>
      %119 = vector.shape_cast %118 : vector<8x128xf32> to vector<1x8x128xf32>
      %cst_47 = arith.constant dense<0.000000e+00> : vector<1xf32>
      %120 = vector.multi_reduction <add>, %119, %cst_47 [1, 2] : vector<1x8x128xf32> to vector<1xf32>
      %121 = vector.shape_cast %120 : vector<1xf32> to vector<1x1x1xf32>
      %122 = vector.extract %121[0, 0, 0] : f32 from vector<1x1x1xf32>
      %123 = vector.broadcast %122 : f32 to vector<1x1xf32>
      %cst_48 = arith.constant 1.600000e+01 : f32
      %124 = vector.broadcast %cst_48 : f32 to vector<1x1xf32>
      %125 = arith.divf %123, %124 : vector<1x1xf32>
      %126 = tpu.iota {dimensions = array<i32: 1>} : vector<1x128xi32>
      %c0_i32_49 = arith.constant 0 : i32
      %127 = vector.broadcast %c0_i32_49 : i32 to vector<1x128xi32>
      %128 = arith.cmpi eq, %126, %127 : vector<1x128xi32>
      %cst_50 = arith.constant 0.000000e+00 : f32
      %129 = vector.shape_cast %109 : vector<1x1xf32> to vector<1x1xf32>
      %130 = vector.broadcast %129 : vector<1x1xf32> to vector<1x128xf32>
      %131 = vector.broadcast %cst_50 : f32 to vector<1x128xf32>
      %132 = arith.select %128, %130, %131 : vector<1x128xi1>, vector<1x128xf32>
      %c1_i32 = arith.constant 1 : i32
      %133 = vector.broadcast %c1_i32 : i32 to vector<1x128xi32>
      %134 = arith.cmpi eq, %126, %133 : vector<1x128xi32>
      %135 = vector.shape_cast %117 : vector<1x1xf32> to vector<1x1xf32>
      %136 = vector.broadcast %135 : vector<1x1xf32> to vector<1x128xf32>
      %137 = arith.select %134, %136, %132 : vector<1x128xi1>, vector<1x128xf32>
      %c2_i32 = arith.constant 2 : i32
      %138 = vector.broadcast %c2_i32 : i32 to vector<1x128xi32>
      %139 = arith.cmpi eq, %126, %138 : vector<1x128xi32>
      %140 = vector.shape_cast %125 : vector<1x1xf32> to vector<1x1xf32>
      %141 = vector.broadcast %140 : vector<1x1xf32> to vector<1x128xf32>
      %142 = arith.select %139, %141, %137 : vector<1x128xi1>, vector<1x128xf32>
      %c0_51 = arith.constant 0 : index
      %c0_52 = arith.constant 0 : index
      %143 = vector.load %arg6[%c0_51, %c0_52] : memref<1x128xf32, #tpu.memory_space<vmem>>, vector<1x128xf32>
      tpu.vector_store %arg6[%c0_51, %c0_52], %142 {strides = array<i32>} : memref<1x128xf32, #tpu.memory_space<vmem>>, vector<1x128xf32>,
    } else {
    }
    return
  }
  func.func @transform_0(%arg0: i32) -> (i32, i32) {
    %c0_i32 = arith.constant 0 : i32
    %c0_i32_0 = arith.constant 0 : i32
    return %arg0, %c0_i32 : i32, i32
  }
  func.func @transform_1(%arg0: i32) -> (i32, i32) {
    %c0_i32 = arith.constant 0 : i32
    %c0_i32_0 = arith.constant 0 : i32
    return %arg0, %c0_i32 : i32, i32
  }
  func.func @transform_2(%arg0: i32) -> (i32, i32) {
    %c0_i32 = arith.constant 0 : i32
    %c0_i32_0 = arith.constant 0 : i32
    return %arg0, %c0_i32 : i32, i32
  }
  func.func @transform_3(%arg0: i32) -> (i32, i32) {
    %c0_i32 = arith.constant 0 : i32
    %c0_i32_0 = arith.constant 0 : i32
    %c0_i32_1 = arith.constant 0 : i32
    return %c0_i32, %c0_i32_0 : i32, i32
  }
  func.func @transform_4(%arg0: i32) -> (i32, i32) {
    %c0_i32 = arith.constant 0 : i32
    %c0_i32_0 = arith.constant 0 : i32
    %c0_i32_1 = arith.constant 0 : i32
    return %c0_i32, %c0_i32_0 : i32, i32
  }
  func.func @transform_5(%arg0: i32) -> (i32, i32) {
    %c0_i32 = arith.constant 0 : i32
    %c0_i32_0 = arith.constant 0 : i32
    %c0_i32_1 = arith.constant 0 : i32
    return %c0_i32, %c0_i32_0 : i32, i32
  }
}

</mosaic_0001>

<llo_original>
// kernel: tpu_custom_call.1
$region0: #{tpu_custom_call.1}
  #allocation0 [shape = 'u32[]', space=smem, size = 0x4, offset = 0x4, fixed_abs, tag = 'smem constant byte address 0x4 - core index']
  #allocation1 [shape = 'u32[144,128]{1,0:T(1,128)}', space=vmem, size = 0x12000, scoped, tag = 'internal scratch']
  #allocation2 [shape = 'f32[8,128]{1,0:T(8,128)}', space=vmem, size = 0x1000, scoped, tag = 'scratch operand']
  #allocation3 [shape = 'f32[8,128]{1,0:T(8,128)}', space=vmem, size = 0x1000, scoped, tag = 'scratch operand']
  #allocation4 [shape = 'f32[8,128]{1,0:T(8,128)}', space=vmem, size = 0x1000, scoped, tag = 'scratch operand']
  %s0 = inlined_call_operand.vmem [shape: f32[56,32], index: 0, kind: input, shape index: {}]
  %s1 = inlined_call_operand.vmem [shape: s32[56,1], index: 1, kind: input, shape index: {}]
  %s2 = inlined_call_operand.vmem [shape: s32[56,1], index: 2, kind: input, shape index: {}]
  %s3 = inlined_call_operand.vmem [shape: bf16[32,384], index: 3, kind: input, shape index: {}]
  %s4 = inlined_call_operand.vmem [shape: f32[1,384], index: 4, kind: input, shape index: {}]
  %s5 = inlined_call_operand.hbm [shape: f32[1,128], index: 5, kind: output, shape index: {}]
  %s6 = sld [smem:[#allocation0]]
  $region38: #{tpu_custom_call.1} parent=0
    _
  %s8 = ssub.s32 1, %s6
  %s9 = scalar_select 0, %s8, %s6
  $region1: #{tpu_custom_call.1} parent=0
    #allocation5 [shape = 'u8[512]{0}', space=vmem, size = 0x400, scoped, tag = 'output window, operand 0, single buffered']
    #allocation6 [shape = 's32[1]{0}', space=sflag, size = 0x4, scoped, tag = 'scoped memory for tpu_custom_call.1']
    %10 = vsyncpa [#allocation6], 0
    // Predicated region
    $region2: #{tpu_custom_call.1} parent=1 // pred_check
      _
    $region3: #{tpu_custom_call.1} parent=1 // pred_check_branch
      %12 = sbr.rel (0) target = $region5
    $region4: #{tpu_custom_call.1} parent=1 // pred_region
      _
    $region5: #{tpu_custom_call.1} parent=1 // pred_fallthru
      _
    // Predicated region
    $region6: #{tpu_custom_call.1} parent=1 // pred_check
      _
    $region7: #{tpu_custom_call.1} parent=1 // pred_check_branch
      %14 = sbr.rel (0) target = $region9
    $region8: #{tpu_custom_call.1} parent=1 // pred_region
      _
    $region9: #{tpu_custom_call.1} parent=1 // pred_fallthru
      _
    // Predicated region
    $region10: #{tpu_custom_call.1} parent=1 // pred_check
      _
    $region11: #{tpu_custom_call.1} parent=1 // pred_check_branch
      %16 = sbr.rel (0) target = $region13
    $region12: #{tpu_custom_call.1} parent=1 // pred_region
      _
    $region13: #{tpu_custom_call.1} parent=1 // pred_fallthru
      _
    // Predicated region
    $region14: #{tpu_custom_call.1} parent=1 // pred_check
      _
    $region15: #{tpu_custom_call.1} parent=1 // pred_check_branch
      %18 = sbr.rel (0) target = $region17
    $region16: #{tpu_custom_call.1} parent=1 // pred_region
      _
    $region17: #{tpu_custom_call.1} parent=1 // pred_fallthru
      _
    // Predicated region
    $region18: #{tpu_custom_call.1} parent=1 // pred_check
      _
    $region19: #{tpu_custom_call.1} parent=1 // pred_check_branch
      %20 = sbr.rel (0) target = $region21
    $region20: #{tpu_custom_call.1} parent=1 // pred_region
      _
    $region21: #{tpu_custom_call.1} parent=1 // pred_fallthru
      _
    %p22 = scmp.eq.s32.totalorder 0, 0
    // Predicated region
    $region22: #{tpu_custom_call.1} parent=1 // pred_check
      %p23 = pneg %p22
    $region23: #{tpu_custom_call.1} parent=1 // pred_check_branch
      %25 = sbr.rel (%p23) target = $region25
    $region24: #{tpu_custom_call.1} parent=1 // pred_region
      %26 = vst [vmem:[#allocation2] sm:$0xff] 0.0
      %27 = vst [vmem:[#allocation3] sm:$0xff] 0.0
      %28 = vst [vmem:[#allocation4] sm:$0xff] 0.0
    $region25: #{tpu_custom_call.1} parent=1 // pred_fallthru
      _
    %v29 = vld [vmem:[%s3] sm:$0xff]
    %v30 = vld [vmem:[%s3 + $0x8] sm:$0xf]
    %v31 = vld [vmem:[%s3 + $0xc] sm:$0xff]
    %v32 = vld [vmem:[%s3 + $0x14] sm:$0xf]
    %v33 = vld [vmem:[%s3 + $0x18] sm:$0xff]
    %v34 = vld [vmem:[%s3 + $0x20] sm:$0xf]
    %v35 = vld [vmem:[%s3 + $0x24] sm:$0xff]
    %v36 = vld [vmem:[%s3 + $0x2c] sm:$0xf]
    %v37 = vld [vmem:[%s4] sm:$0x7]
    %v38 = vlaneseq
    %v39 = vand.u32 %v38, 127
    %v40 = vld [vmem:[%s0] sm:$0xff]
    %v41 = vld [vmem:[%s0 + $0x8] sm:$0xff]
    %v42 = vld [vmem:[%s0 + $0x10] sm:$0xff]
    %v43 = vld [vmem:[%s0 + $0x18] sm:$0xff]
    %v44 = vld [vmem:[%s0 + $0x20] sm:$0xff]
    %v45 = vld [vmem:[%s0 + $0x28] sm:$0xff]
    %v46 = vld [vmem:[%s0 + $0x30] sm:$0xff]
    %v47 = vld [vmem:[%s1] sm:$0xff]
    %v48 = vld [vmem:[%s1 + $0x8] sm:$0xff]
    %v49 = vld [vmem:[%s1 + $0x10] sm:$0xff]
    %v50 = vld [vmem:[%s1 + $0x18] sm:$0xff]
    %v51 = vld [vmem:[%s1 + $0x20] sm:$0xff]
    %v52 = vld [vmem:[%s1 + $0x28] sm:$0xff]
    %v53 = vld [vmem:[%s1 + $0x30] sm:$0xff]
    %v54 = vld [vmem:[%s2] sm:$0xff]
    %v55 = vld [vmem:[%s2 + $0x8] sm:$0xff]
    %v56 = vld [vmem:[%s2 + $0x10] sm:$0xff]
    %v57 = vld [vmem:[%s2 + $0x18] sm:$0xff]
    %v58 = vld [vmem:[%s2 + $0x20] sm:$0xff]
    %v59 = vld [vmem:[%s2 + $0x28] sm:$0xff]
    %v60 = vld [vmem:[%s2 + $0x30] sm:$0xff]
    %v61 = vpack.c.bf16 %v41, %v40
    %v62 = vpack.c.bf16 %v43, %v42
    %v63 = vpack.c.bf16 %v45, %v44
    %v64 = vpack.c.bf16 %v46, %v46
    %v66 = vlaneseq
    %v67 = vshrl.u32 %v66, 7
    %v68 = vsub.s32 0, %v67
    %v69 = vrot.slane %v37, %v68
    %v70 = vlaneseq
    %v71 = vshrl.u32 %v70, 7
    %v72 = vsub.s32 1, %v71
    %v73 = vrot.slane %v37, %v72
    %v74 = vlaneseq
    %v75 = vshrl.u32 %v74, 7
    %v76 = vsub.s32 2, %v75
    %v77 = vrot.slane %v37, %v76
    %v89 = vunpack.c.l.b16 %v29
    %v90 = vunpack.c.h.b16 %v29
    %v91 = vunpack.c.l.b16 %v30
    %v92 = vunpack.c.l.b16 %v31
    %v93 = vunpack.c.h.b16 %v31
    %v94 = vunpack.c.l.b16 %v32
    %v95 = vunpack.c.l.b16 %v33
    %v96 = vunpack.c.h.b16 %v33
    %v97 = vunpack.c.l.b16 %v34
    %v98 = vunpack.c.l.b16 %v35
    %v99 = vunpack.c.h.b16 %v35
    %v100 = vunpack.c.l.b16 %v36
    %v101 = vpack.c.b16 %v92, %v89
    %v102 = vpack.c.b16 %v93, %v90
    %v103 = vpack.c.b16 %v94, %v91
    %v104 = vpack.c.b16 %v98, %v95
    %v105 = vpack.c.b16 %v99, %v96
    %v106 = vpack.c.b16 %v100, %v97
    %vm113 = vcmask 261120
    %v115 = vsel %vm113, %v61, 0
    %v118 = vsel %vm113, %v62, 0
    %v121 = vsel %vm113, %v63, 0
    %v124 = vsel %vm113, %v64, 0
    %126 = vmatprep.subr.bf16.mxu0 0
    %127 = vmatpush1.bf16.msra.mxu0 0
    %128 = vmatprep.subr.bf16.mxu0 0
    %129 = vmatpush1.bf16.msra.mxu0 0
    %130 = vmatprep.subr.bf16.mxu0 0
    %131 = vmatpush1.bf16.msra.mxu0 0
    %132 = vmatprep.subr.bf16.mxu0 0
    %133 = vmatpush1.bf16.msra.mxu0 0
    %134 = vmatprep.subr.bf16.mxu0 0
    %135 = vmatpush1.bf16.msra.mxu0 0
    %136 = vmatprep.subr.bf16.mxu0 0
    %137 = vmatpush1.bf16.msra.mxu0 0
    %138 = vmatprep.subr.bf16.mxu0 %v105
    %139 = vmatpush1.bf16.msra.mxu0 %v104
    %140 = vmatprep.subr.bf16.mxu0 %v102
    %141 = vmatpush1.bf16.msra.mxu0 %v101
    %142 = vmatprep.subr.bf16.mxu0 0
    %143 = vmatpush2.bf16.msra.mxu0 0
    %144 = vmatprep.subr.bf16.mxu0 0
    %145 = vmatpush2.bf16.msra.mxu0 0
    %146 = vmatprep.subr.bf16.mxu0 0
    %147 = vmatpush2.bf16.msra.mxu0 0
    %148 = vmatprep.subr.bf16.mxu0 0
    %149 = vmatpush2.bf16.msra.mxu0 0
    %150 = vmatprep.subr.bf16.mxu0 0
    %151 = vmatpush2.bf16.msra.mxu0 0
    %152 = vmatprep.subr.bf16.mxu0 0
    %153 = vmatpush2.bf16.msra.mxu0 0
    %154 = vmatprep.subr.bf16.mxu0 0
    %155 = vmatpush2.bf16.msra.mxu0 0
    %156 = vmatprep.subr.bf16.mxu0 0
    %157 = vmatpush2.bf16.msra.mxu0 0
    %158 = vmatprep.mubr.bf16.mxu0 0
    %159 = vmatmul.mubr.bf16.gmra.mxu0 %v115
    %v160 = vpop.f32.mrf.mxu0
    %v161 = vadd.f32 %v69, %v160
    %v162 = vpop.f32.mrf.mxu0
    %v163 = vadd.f32 %v73, %v162
    %v164 = vpop.f32.mrf.mxu0
    %v165 = vadd.f32 %v69, %v164
    %v166 = vpop.f32.mrf.mxu0
    %v167 = vadd.f32 %v73, %v166
    %168 = vmatprep.mubr.bf16.mxu0 0
    %169 = vmatmul.mubr.bf16.gmra.mxu0 %v118
    %v170 = vpop.f32.mrf.mxu0
    %v171 = vadd.f32 %v69, %v170
    %v172 = vpop.f32.mrf.mxu0
    %v173 = vadd.f32 %v73, %v172
    %v174 = vpop.f32.mrf.mxu0
    %v175 = vadd.f32 %v69, %v174
    %v176 = vpop.f32.mrf.mxu0
    %v177 = vadd.f32 %v73, %v176
    %178 = vmatprep.mubr.bf16.mxu0 0
    %179 = vmatmul.mubr.bf16.gmra.mxu0 %v121
    %v180 = vpop.f32.mrf.mxu0
    %v181 = vadd.f32 %v69, %v180
    %v182 = vpop.f32.mrf.mxu0
    %v183 = vadd.f32 %v73, %v182
    %v184 = vpop.f32.mrf.mxu0
    %v185 = vadd.f32 %v69, %v184
    %v186 = vpop.f32.mrf.mxu0
    %v187 = vadd.f32 %v73, %v186
    %188 = vmatprep.mubr.bf16.mxu0 0
    %189 = vmatmul.mubr.bf16.gmra.mxu0 %v124
    %v190 = vpop.f32.mrf.mxu0
    %v191 = vadd.f32 %v69, %v190
    %v192 = vpop.f32.mrf.mxu0
    %v193 = vadd.f32 %v73, %v192
    %v194 = vpop.f32.mrf.mxu0
    %v195 = vpop.f32.mrf.mxu0
    %196 = vdwg.mxu0
    %197 = vmatprep.subr.bf16.mxu0 0
    %198 = vmatpush1.bf16.msra.mxu0 0
    %199 = vmatprep.subr.bf16.mxu0 0
    %200 = vmatpush1.bf16.msra.mxu0 0
    %201 = vmatprep.subr.bf16.mxu0 0
    %202 = vmatpush1.bf16.msra.mxu0 0
    %203 = vmatprep.subr.bf16.mxu0 0
    %204 = vmatpush1.bf16.msra.mxu0 0
    %205 = vmatprep.subr.bf16.mxu0 0
    %206 = vmatpush1.bf16.msra.mxu0 0
    %207 = vmatprep.subr.bf16.mxu0 0
    %208 = vmatpush1.bf16.msra.mxu0 0
    %209 = vmatprep.subr.bf16.mxu0 0
    %210 = vmatpush1.bf16.msra.mxu0 %v106
    %211 = vmatprep.subr.bf16.mxu0 0
    %212 = vmatpush1.bf16.msra.mxu0 %v103
    %213 = vmatprep.subr.bf16.mxu0 0
    %214 = vmatpush2.bf16.msra.mxu0 0
    %215 = vmatprep.subr.bf16.mxu0 0
    %216 = vmatpush2.bf16.msra.mxu0 0
    %217 = vmatprep.subr.bf16.mxu0 0
    %218 = vmatpush2.bf16.msra.mxu0 0
    %219 = vmatprep.subr.bf16.mxu0 0
    %220 = vmatpush2.bf16.msra.mxu0 0
    %221 = vmatprep.subr.bf16.mxu0 0
    %222 = vmatpush2.bf16.msra.mxu0 0
    %223 = vmatprep.subr.bf16.mxu0 0
    %224 = vmatpush2.bf16.msra.mxu0 0
    %225 = vmatprep.subr.bf16.mxu0 0
    %226 = vmatpush2.bf16.msra.mxu0 0
    %227 = vmatprep.subr.bf16.mxu0 0
    %228 = vmatpush2.bf16.msra.mxu0 0
    %229 = vmatprep.mubr.bf16.mxu0 0
    %230 = vmatmul.mubr.bf16.gmra.mxu0 %v115
    %v231 = vpop.f32.mrf.mxu0
    %v232 = vadd.f32 %v77, %v231
    %v233 = vpop.f32.mrf.mxu0
    %v234 = vpop.f32.mrf.mxu0
    %v235 = vadd.f32 %v77, %v234
    %v236 = vpop.f32.mrf.mxu0
    %237 = vmatprep.mubr.bf16.mxu0 0
    %238 = vmatmul.mubr.bf16.gmra.mxu0 %v118
    %v239 = vpop.f32.mrf.mxu0
    %v240 = vadd.f32 %v77, %v239
    %v241 = vpop.f32.mrf.mxu0
    %v242 = vpop.f32.mrf.mxu0
    %v243 = vadd.f32 %v77, %v242
    %v244 = vpop.f32.mrf.mxu0
    %245 = vmatprep.mubr.bf16.mxu0 0
    %246 = vmatmul.mubr.bf16.gmra.mxu0 %v121
    %v247 = vpop.f32.mrf.mxu0
    %v248 = vadd.f32 %v77, %v247
    %v249 = vpop.f32.mrf.mxu0
    %v250 = vpop.f32.mrf.mxu0
    %v251 = vadd.f32 %v77, %v250
    %v252 = vpop.f32.mrf.mxu0
    %253 = vmatprep.mubr.bf16.mxu0 0
    %254 = vmatmul.mubr.bf16.gmra.mxu0 %v124
    %v255 = vpop.f32.mrf.mxu0
    %v256 = vadd.f32 %v77, %v255
    %v257 = vpop.f32.mrf.mxu0
    %v258 = vpop.f32.mrf.mxu0
    %v259 = vpop.f32.mrf.mxu0
    %260 = vdwg.mxu0
    %261 = vmax.xlane.f32.xlu0 %v161
    %v262 = vpop.xlane.xlu0 %261
    %263 = vmax.xlane.f32.xlu0 %v165
    %v264 = vpop.xlane.xlu0 %263
    %265 = vmax.xlane.f32.xlu0 %v171
    %v266 = vpop.xlane.xlu0 %265
    %267 = vmax.xlane.f32.xlu0 %v175
    %v268 = vpop.xlane.xlu0 %267
    %269 = vmax.xlane.f32.xlu0 %v181
    %v270 = vpop.xlane.xlu0 %269
    %271 = vmax.xlane.f32.xlu0 %v185
    %v272 = vpop.xlane.xlu0 %271
    %273 = vmax.xlane.f32.xlu0 %v191
    %v274 = vpop.xlane.xlu0 %273
    %v275 = vsub.f32 %v161, %v262
    %v276 = vsub.f32 %v165, %v264
    %v277 = vsub.f32 %v171, %v266
    %v278 = vsub.f32 %v175, %v268
    %v279 = vsub.f32 %v181, %v270
    %v280 = vsub.f32 %v185, %v272
    %v281 = vsub.f32 %v191, %v274
    %v282 = vmul.f32 %v275, 1.442695
    %v283 = vpow.pop %v282
    %v284 = vmul.f32 %v276, 1.442695
    %v285 = vpow.pop %v284
    %v286 = vmul.f32 %v277, 1.442695
    %v287 = vpow.pop %v286
    %v288 = vmul.f32 %v278, 1.442695
    %v289 = vpow.pop %v288
    %v290 = vmul.f32 %v279, 1.442695
    %v291 = vpow.pop %v290
    %v292 = vmul.f32 %v280, 1.442695
    %v293 = vpow.pop %v292
    %v294 = vmul.f32 %v281, 1.442695
    %v295 = vpow.pop %v294
    %296 = vadd.xlane.f32.xlu0 %v283
    %v297 = vpop.xlane.xlu0 %296
    %298 = vadd.xlane.f32.xlu0 %v285
    %v299 = vpop.xlane.xlu0 %298
    %300 = vadd.xlane.f32.xlu0 %v287
    %v301 = vpop.xlane.xlu0 %300
    %302 = vadd.xlane.f32.xlu0 %v289
    %v303 = vpop.xlane.xlu0 %302
    %304 = vadd.xlane.f32.xlu0 %v291
    %v305 = vpop.xlane.xlu0 %304
    %306 = vadd.xlane.f32.xlu0 %v293
    %v307 = vpop.xlane.xlu0 %306
    %308 = vadd.xlane.f32.xlu0 %v295
    %v309 = vpop.xlane.xlu0 %308
    %v310 = vlog2.pop %v297
    %v311 = vmul.f32 %v310, 0.6931472
    %v312 = vlog2.pop %v299
    %v313 = vmul.f32 %v312, 0.6931472
    %v314 = vlog2.pop %v301
    %v315 = vmul.f32 %v314, 0.6931472
    %v316 = vlog2.pop %v303
    %v317 = vmul.f32 %v316, 0.6931472
    %v318 = vlog2.pop %v305
    %v319 = vmul.f32 %v318, 0.6931472
    %v320 = vlog2.pop %v307
    %v321 = vmul.f32 %v320, 0.6931472
    %v322 = vlog2.pop %v309
    %v323 = vmul.f32 %v322, 0.6931472
    %v324 = vsub.f32 %v275, %v311
    %v325 = vsub.f32 %v276, %v313
    %v326 = vsub.f32 %v277, %v315
    %v327 = vsub.f32 %v278, %v317
    %v328 = vsub.f32 %v279, %v319
    %v329 = vsub.f32 %v280, %v321
    %v330 = vsub.f32 %v281, %v323
    %v331 = vrcp.pop %v297
    %v332 = vrcp.pop %v299
    %v333 = vrcp.pop %v301
    %v334 = vrcp.pop %v303
    %v335 = vrcp.pop %v305
    %v336 = vrcp.pop %v307
    %v337 = vrcp.pop %v309
    %v338 = vmul.f32 %v283, %v331
    %v339 = vmul.f32 %v285, %v332
    %v340 = vmul.f32 %v287, %v333
    %v341 = vmul.f32 %v289, %v334
    %v342 = vmul.f32 %v291, %v335
    %v343 = vmul.f32 %v293, %v336
    %v344 = vmul.f32 %v295, %v337
    %345 = vmax.xlane.f32.xlu0 %v163
    %v346 = vpop.xlane.xlu0 %345
    %347 = vmax.xlane.f32.xlu0 %v167
    %v348 = vpop.xlane.xlu0 %347
    %349 = vmax.xlane.f32.xlu0 %v173
    %v350 = vpop.xlane.xlu0 %349
    %351 = vmax.xlane.f32.xlu0 %v177
    %v352 = vpop.xlane.xlu0 %351
    %353 = vmax.xlane.f32.xlu0 %v183
    %v354 = vpop.xlane.xlu0 %353
    %355 = vmax.xlane.f32.xlu0 %v187
    %v356 = vpop.xlane.xlu0 %355
    %357 = vmax.xlane.f32.xlu0 %v193
    %v358 = vpop.xlane.xlu0 %357
    %v359 = vsub.f32 %v163, %v346
    %v360 = vsub.f32 %v167, %v348
    %v361 = vsub.f32 %v173, %v350
    %v362 = vsub.f32 %v177, %v352
    %v363 = vsub.f32 %v183, %v354
    %v364 = vsub.f32 %v187, %v356
    %v365 = vsub.f32 %v193, %v358
    %v366 = vmul.f32 %v359, 1.442695
    %v367 = vpow.pop %v366
    %v368 = vmul.f32 %v360, 1.442695
    %v369 = vpow.pop %v368
    %v370 = vmul.f32 %v361, 1.442695
    %v371 = vpow.pop %v370
    %v372 = vmul.f32 %v362, 1.442695
    %v373 = vpow.pop %v372
    %v374 = vmul.f32 %v363, 1.442695
    %v375 = vpow.pop %v374
    %v376 = vmul.f32 %v364, 1.442695
    %v377 = vpow.pop %v376
    %v378 = vmul.f32 %v365, 1.442695
    %v379 = vpow.pop %v378
    %380 = vadd.xlane.f32.xlu0 %v367
    %v381 = vpop.xlane.xlu0 %380
    %382 = vadd.xlane.f32.xlu0 %v369
    %v383 = vpop.xlane.xlu0 %382
    %384 = vadd.xlane.f32.xlu0 %v371
    %v385 = vpop.xlane.xlu0 %384
    %386 = vadd.xlane.f32.xlu0 %v373
    %v387 = vpop.xlane.xlu0 %386
    %388 = vadd.xlane.f32.xlu0 %v375
    %v389 = vpop.xlane.xlu0 %388
    %390 = vadd.xlane.f32.xlu0 %v377
    %v391 = vpop.xlane.xlu0 %390
    %392 = vadd.xlane.f32.xlu0 %v379
    %v393 = vpop.xlane.xlu0 %392
    %v394 = vlog2.pop %v381
    %v395 = vmul.f32 %v394, 0.6931472
    %v396 = vlog2.pop %v383
    %v397 = vmul.f32 %v396, 0.6931472
    %v398 = vlog2.pop %v385
    %v399 = vmul.f32 %v398, 0.6931472
    %v400 = vlog2.pop %v387
    %v401 = vmul.f32 %v400, 0.6931472
    %v402 = vlog2.pop %v389
    %v403 = vmul.f32 %v402, 0.6931472
    %v404 = vlog2.pop %v391
    %v405 = vmul.f32 %v404, 0.6931472
    %v406 = vlog2.pop %v393
    %v407 = vmul.f32 %v406, 0.6931472
    %v408 = vsub.f32 %v359, %v395
    %v409 = vsub.f32 %v360, %v397
    %v410 = vsub.f32 %v361, %v399
    %v411 = vsub.f32 %v362, %v401
    %v412 = vsub.f32 %v363, %v403
    %v413 = vsub.f32 %v364, %v405
    %v414 = vsub.f32 %v365, %v407
    %v415 = vrcp.pop %v381
    %v416 = vrcp.pop %v383
    %v417 = vrcp.pop %v385
    %v418 = vrcp.pop %v387
    %v419 = vrcp.pop %v389
    %v420 = vrcp.pop %v391
    %v421 = vrcp.pop %v393
    %v422 = vmul.f32 %v367, %v415
    %v423 = vmul.f32 %v369, %v416
    %v424 = vmul.f32 %v371, %v417
    %v425 = vmul.f32 %v373, %v418
    %v426 = vmul.f32 %v375, %v419
    %v427 = vmul.f32 %v377, %v420
    %v428 = vmul.f32 %v379, %v421
    %429 = vmax.xlane.f32.xlu0 %v232
    %v430 = vpop.xlane.xlu0 %429
    %431 = vmax.xlane.f32.xlu0 %v235
    %v432 = vpop.xlane.xlu0 %431
    %433 = vmax.xlane.f32.xlu0 %v240
    %v434 = vpop.xlane.xlu0 %433
    %435 = vmax.xlane.f32.xlu0 %v243
    %v436 = vpop.xlane.xlu0 %435
    %437 = vmax.xlane.f32.xlu0 %v248
    %v438 = vpop.xlane.xlu0 %437
    %439 = vmax.xlane.f32.xlu0 %v251
    %v440 = vpop.xlane.xlu0 %439
    %441 = vmax.xlane.f32.xlu0 %v256
    %v442 = vpop.xlane.xlu0 %441
    %v443 = vsub.f32 %v232, %v430
    %v444 = vsub.f32 %v235, %v432
    %v445 = vsub.f32 %v240, %v434
    %v446 = vsub.f32 %v243, %v436
    %v447 = vsub.f32 %v248, %v438
    %v448 = vsub.f32 %v251, %v440
    %v449 = vsub.f32 %v256, %v442
    %v450 = vmul.f32 %v443, 1.442695
    %v451 = vpow.pop %v450
    %v452 = vmul.f32 %v444, 1.442695
    %v453 = vpow.pop %v452
    %v454 = vmul.f32 %v445, 1.442695
    %v455 = vpow.pop %v454
    %v456 = vmul.f32 %v446, 1.442695
    %v457 = vpow.pop %v456
    %v458 = vmul.f32 %v447, 1.442695
    %v459 = vpow.pop %v458
    %v460 = vmul.f32 %v448, 1.442695
    %v461 = vpow.pop %v460
    %v462 = vmul.f32 %v449, 1.442695
    %v463 = vpow.pop %v462
    %464 = vadd.xlane.f32.xlu0 %v451
    %v465 = vpop.xlane.xlu0 %464
    %466 = vadd.xlane.f32.xlu0 %v453
    %v467 = vpop.xlane.xlu0 %466
    %468 = vadd.xlane.f32.xlu0 %v455
    %v469 = vpop.xlane.xlu0 %468
    %470 = vadd.xlane.f32.xlu0 %v457
    %v471 = vpop.xlane.xlu0 %470
    %472 = vadd.xlane.f32.xlu0 %v459
    %v473 = vpop.xlane.xlu0 %472
    %474 = vadd.xlane.f32.xlu0 %v461
    %v475 = vpop.xlane.xlu0 %474
    %476 = vadd.xlane.f32.xlu0 %v463
    %v477 = vpop.xlane.xlu0 %476
    %v478 = vlog2.pop %v465
    %v479 = vmul.f32 %v478, 0.6931472
    %v480 = vlog2.pop %v467
    %v481 = vmul.f32 %v480, 0.6931472
    %v482 = vlog2.pop %v469
    %v483 = vmul.f32 %v482, 0.6931472
    %v484 = vlog2.pop %v471
    %v485 = vmul.f32 %v484, 0.6931472
    %v486 = vlog2.pop %v473
    %v487 = vmul.f32 %v486, 0.6931472
    %v488 = vlog2.pop %v475
    %v489 = vmul.f32 %v488, 0.6931472
    %v490 = vlog2.pop %v477
    %v491 = vmul.f32 %v490, 0.6931472
    %v492 = vsub.f32 %v443, %v479
    %v493 = vsub.f32 %v444, %v481
    %v494 = vsub.f32 %v445, %v483
    %v495 = vsub.f32 %v446, %v485
    %v496 = vsub.f32 %v447, %v487
    %v497 = vsub.f32 %v448, %v489
    %v498 = vsub.f32 %v449, %v491
    %v499 = vrcp.pop %v465
    %v500 = vrcp.pop %v467
    %v501 = vrcp.pop %v469
    %v502 = vrcp.pop %v471
    %v503 = vrcp.pop %v473
    %v504 = vrcp.pop %v475
    %v505 = vrcp.pop %v477
    %v506 = vmul.f32 %v451, %v499
    %v507 = vmul.f32 %v453, %v500
    %v508 = vmul.f32 %v455, %v501
    %v509 = vmul.f32 %v457, %v502
    %v510 = vmul.f32 %v459, %v503
    %v511 = vmul.f32 %v461, %v504
    %v512 = vmul.f32 %v463, %v505
    %v513 = vsub.f32 %v338, %v422
    %v514 = vsub.f32 %v339, %v423
    %v515 = vsub.f32 %v340, %v424
    %v516 = vsub.f32 %v341, %v425
    %v517 = vsub.f32 %v342, %v426
    %v518 = vsub.f32 %v343, %v427
    %v519 = vsub.f32 %v344, %v428
    %v520 = vsub.f32 %v324, %v408
    %v521 = vsub.f32 %v325, %v409
    %v522 = vsub.f32 %v326, %v410
    %v523 = vsub.f32 %v327, %v411
    %v524 = vsub.f32 %v328, %v412
    %v525 = vsub.f32 %v329, %v413
    %v526 = vsub.f32 %v330, %v414
    %v527 = vmul.f32 %v513, %v520
    %v528 = vmul.f32 %v514, %v521
    %v529 = vmul.f32 %v515, %v522
    %v530 = vmul.f32 %v516, %v523
    %v531 = vmul.f32 %v517, %v524
    %v532 = vmul.f32 %v518, %v525
    %v533 = vmul.f32 %v519, %v526
    %v534 = vsub.f32 %v338, %v506
    %v535 = vsub.f32 %v339, %v507
    %v536 = vsub.f32 %v340, %v508
    %v537 = vsub.f32 %v341, %v509
    %v538 = vsub.f32 %v342, %v510
    %v539 = vsub.f32 %v343, %v511
    %v540 = vsub.f32 %v344, %v512
    %v541 = vsub.f32 %v324, %v492
    %v542 = vsub.f32 %v325, %v493
    %v543 = vsub.f32 %v326, %v494
    %v544 = vsub.f32 %v327, %v495
    %v545 = vsub.f32 %v328, %v496
    %v546 = vsub.f32 %v329, %v497
    %v547 = vsub.f32 %v330, %v498
    %v548 = vmul.f32 %v534, %v541
    %v549 = vmul.f32 %v535, %v542
    %v550 = vmul.f32 %v536, %v543
    %v551 = vmul.f32 %v537, %v544
    %v552 = vmul.f32 %v538, %v545
    %v553 = vmul.f32 %v539, %v546
    %v554 = vmul.f32 %v540, %v547
    %v555 = vadd.f32 %v527, %v548
    %v556 = vadd.f32 %v528, %v549
    %v557 = vadd.f32 %v529, %v550
    %v558 = vadd.f32 %v530, %v551
    %v559 = vadd.f32 %v531, %v552
    %v560 = vadd.f32 %v532, %v553
    %v561 = vadd.f32 %v533, %v554
    %v562 = vsub.f32 %v422, %v506
    %v563 = vsub.f32 %v423, %v507
    %v564 = vsub.f32 %v424, %v508
    %v565 = vsub.f32 %v425, %v509
    %v566 = vsub.f32 %v426, %v510
    %v567 = vsub.f32 %v427, %v511
    %v568 = vsub.f32 %v428, %v512
    %v569 = vsub.f32 %v408, %v492
    %v570 = vsub.f32 %v409, %v493
    %v571 = vsub.f32 %v410, %v494
    %v572 = vsub.f32 %v411, %v495
    %v573 = vsub.f32 %v412, %v496
    %v574 = vsub.f32 %v413, %v497
    %v575 = vsub.f32 %v414, %v498
    %v576 = vmul.f32 %v562, %v569
    %v577 = vmul.f32 %v563, %v570
    %v578 = vmul.f32 %v564, %v571
    %v579 = vmul.f32 %v565, %v572
    %v580 = vmul.f32 %v566, %v573
    %v581 = vmul.f32 %v567, %v574
    %v582 = vmul.f32 %v568, %v575
    %v583 = vadd.f32 %v555, %v576
    %v584 = vadd.f32 %v556, %v577
    %v585 = vadd.f32 %v557, %v578
    %v586 = vadd.f32 %v558, %v579
    %v587 = vadd.f32 %v559, %v580
    %v588 = vadd.f32 %v560, %v581
    %v589 = vadd.f32 %v561, %v582
    %590 = vset.pattern.permute.xlu0 0
    %591 = vperm.xlu0 %590, %v47
    %v592 = vpop.permute.xlu0 %591
    %593 = vset.pattern.permute.xlu0 0
    %594 = vperm.xlu0 %593, %v48
    %v595 = vpop.permute.xlu0 %594
    %596 = vset.pattern.permute.xlu0 0
    %597 = vperm.xlu0 %596, %v49
    %v598 = vpop.permute.xlu0 %597
    %599 = vset.pattern.permute.xlu0 0
    %600 = vperm.xlu0 %599, %v50
    %v601 = vpop.permute.xlu0 %600
    %602 = vset.pattern.permute.xlu0 0
    %603 = vperm.xlu0 %602, %v51
    %v604 = vpop.permute.xlu0 %603
    %605 = vset.pattern.permute.xlu0 0
    %606 = vperm.xlu0 %605, %v52
    %v607 = vpop.permute.xlu0 %606
    %608 = vset.pattern.permute.xlu0 0
    %609 = vperm.xlu0 %608, %v53
    %v610 = vpop.permute.xlu0 %609
    %vm611 = vcmp.eq.s32.totalorder %v39, %v592
    %vm612 = vcmp.eq.s32.totalorder %v39, %v595
    %vm613 = vcmp.eq.s32.totalorder %v39, %v598
    %vm614 = vcmp.eq.s32.totalorder %v39, %v601
    %vm615 = vcmp.eq.s32.totalorder %v39, %v604
    %vm616 = vcmp.eq.s32.totalorder %v39, %v607
    %vm617 = vcmp.eq.s32.totalorder %v39, %v610
    %v618 = vsub.f32 0.0, %v324
    %v619 = vsub.f32 0.0, %v325
    %v620 = vsub.f32 0.0, %v326
    %v621 = vsub.f32 0.0, %v327
    %v622 = vsub.f32 0.0, %v328
    %v623 = vsub.f32 0.0, %v329
    %v624 = vsub.f32 0.0, %v330
    %v625 = vsel %vm611, %v618, 0.0
    %v626 = vsel %vm612, %v619, 0.0
    %v627 = vsel %vm613, %v620, 0.0
    %v628 = vsel %vm614, %v621, 0.0
    %v629 = vsel %vm615, %v622, 0.0
    %v630 = vsel %vm616, %v623, 0.0
    %v631 = vsel %vm617, %v624, 0.0
    %632 = vset.pattern.permute.xlu0 0
    %633 = vperm.xlu0 %632, %v54
    %v634 = vpop.permute.xlu0 %633
    %635 = vset.pattern.permute.xlu0 0
    %636 = vperm.xlu0 %635, %v55
    %v637 = vpop.permute.xlu0 %636
    %638 = vset.pattern.permute.xlu0 0
    %639 = vperm.xlu0 %638, %v56
    %v640 = vpop.permute.xlu0 %639
    %641 = vset.pattern.permute.xlu0 0
    %642 = vperm.xlu0 %641, %v57
    %v643 = vpop.permute.xlu0 %642
    %644 = vset.pattern.permute.xlu0 0
    %645 = vperm.xlu0 %644, %v58
    %v646 = vpop.permute.xlu0 %645
    %647 = vset.pattern.permute.xlu0 0
    %648 = vperm.xlu0 %647, %v59
    %v649 = vpop.permute.xlu0 %648
    %650 = vset.pattern.permute.xlu0 0
    %651 = vperm.xlu0 %650, %v60
    %v652 = vpop.permute.xlu0 %651
    %vm653 = vcmp.eq.s32.totalorder %v39, %v634
    %vm654 = vcmp.eq.s32.totalorder %v39, %v637
    %vm655 = vcmp.eq.s32.totalorder %v39, %v640
    %vm656 = vcmp.eq.s32.totalorder %v39, %v643
    %vm657 = vcmp.eq.s32.totalorder %v39, %v646
    %vm658 = vcmp.eq.s32.totalorder %v39, %v649
    %vm659 = vcmp.eq.s32.totalorder %v39, %v652
    %v660 = vsub.f32 0.0, %v408
    %v661 = vsub.f32 0.0, %v409
    %v662 = vsub.f32 0.0, %v410
    %v663 = vsub.f32 0.0, %v411
    %v664 = vsub.f32 0.0, %v412
    %v665 = vsub.f32 0.0, %v413
    %v666 = vsub.f32 0.0, %v414
    %v667 = vsel %vm653, %v660, 0.0
    %v668 = vsel %vm654, %v661, 0.0
    %v669 = vsel %vm655, %v662, 0.0
    %v670 = vsel %vm656, %v663, 0.0
    %v671 = vsel %vm657, %v664, 0.0
    %v672 = vsel %vm658, %v665, 0.0
    %v673 = vsel %vm659, %v666, 0.0
    %v674 = vld [vmem:[#allocation2] sm:$0xff]
    %v675 = vadd.f32 %v583, %v584
    %v676 = vadd.f32 %v675, %v585
    %v677 = vadd.f32 %v676, %v586
    %v678 = vadd.f32 %v677, %v587
    %v679 = vadd.f32 %v678, %v588
    %v680 = vadd.f32 %v679, %v589
    %v681 = vadd.f32 %v674, %v680
    %682 = vst [vmem:[#allocation2] sm:$0xff] %v681
    %v683 = vld [vmem:[#allocation3] sm:$0xff]
    %v684 = vadd.f32 %v625, %v626
    %v685 = vadd.f32 %v684, %v627
    %v686 = vadd.f32 %v685, %v628
    %v687 = vadd.f32 %v686, %v629
    %v688 = vadd.f32 %v687, %v630
    %v689 = vadd.f32 %v688, %v631
    %v690 = vadd.f32 %v683, %v689
    %691 = vst [vmem:[#allocation3] sm:$0xff] %v690
    %v692 = vld [vmem:[#allocation4] sm:$0xff]
    %v693 = vadd.f32 %v667, %v668
    %v694 = vadd.f32 %v693, %v669
    %v695 = vadd.f32 %v694, %v670
    %v696 = vadd.f32 %v695, %v671
    %v697 = vadd.f32 %v696, %v672
    %v698 = vadd.f32 %v697, %v673
    %v699 = vadd.f32 %v692, %v698
    %700 = vst [vmem:[#allocation4] sm:$0xff] %v699
    // Predicated region
    $region26: #{tpu_custom_call.1} parent=1 // pred_check
      %p701 = pneg %p22
    $region27: #{tpu_custom_call.1} parent=1 // pred_check_branch
      %703 = sbr.rel (%p701) target = $region29
    $region28: #{tpu_custom_call.1} parent=1 // pred_region
      %v704 = vld [vmem:[#allocation2] sm:$0xff]
      %705 = vadd.xlane.f32.xlu0 %v704
      %v706 = vpop.xlane.xlu0 %705
      %v707 = vrot.slane %v706, 4
      %v708 = vadd.f32 %v706, %v707
      %v709 = vrot.slane %v708, 2
      %v710 = vadd.f32 %v708, %v709
      %v711 = vrot.slane %v710, 1
      %v712 = vadd.f32 %v710, %v711
      %s713 = vtos %v712
      %v714 = vstv %s713
      %v715 = vrcp.pop 1344.0
      %v716 = vmul.f32 %v714, %v715
      %v717 = vld [vmem:[#allocation3] sm:$0xff]
      %718 = vadd.xlane.f32.xlu0 %v717
      %v719 = vpop.xlane.xlu0 %718
      %v720 = vrot.slane %v719, 4
      %v721 = vadd.f32 %v719, %v720
      %v722 = vrot.slane %v721, 2
      %v723 = vadd.f32 %v721, %v722
      %v724 = vrot.slane %v723, 1
      %v725 = vadd.f32 %v723, %v724
      %s726 = vtos %v725
      %v727 = vstv %s726
      %v728 = vrcp.pop 16.0
      %v729 = vmul.f32 %v727, %v728
      %v730 = vld [vmem:[#allocation4] sm:$0xff]
      %731 = vadd.xlane.f32.xlu0 %v730
      %v732 = vpop.xlane.xlu0 %731
      %v733 = vrot.slane %v732, 4
      %v734 = vadd.f32 %v732, %v733
      %v735 = vrot.slane %v734, 2
      %v736 = vadd.f32 %v734, %v735
      %v737 = vrot.slane %v736, 1
      %v738 = vadd.f32 %v736, %v737
      %s739 = vtos %v738
      %v740 = vstv %s739
      %v741 = vmul.f32 %v740, %v728
      %vm742 = vcmp.eq.s32.totalorder %v39, 0
      %v743 = vsel %vm742, %v716, 0.0
      %vm744 = vcmp.eq.s32.totalorder %v39, 1
      %v745 = vsel %vm744, %v729, %v743
      %vm746 = vcmp.eq.s32.totalorder %v39, 2
      %v747 = vsel %vm746, %v741, %v745
      %748 = vst [vmem:[#allocation5] sm:$0x1] %v747
    $region29: #{tpu_custom_call.1} parent=1 // pred_fallthru
      _
    // Predicated region
    $region30: #{tpu_custom_call.1} parent=1 // pred_check
      _
    $region31: #{tpu_custom_call.1} parent=1 // pred_check_branch
      %750 = sbr.rel (0) target = $region33
    $region32: #{tpu_custom_call.1} parent=1 // pred_region
      %s752 = ssub.s32 16, 16
      %753 = vsyncadd [#allocation6], %s752
      %s755 = sshll.u32 [#allocation5], 4
      %s756 = int_to_ptr.vmem [resolvable:$true] %s755
      %758 = dma.vmem_to_hbm [thread:$0]  %s756, 16, %s5, [#allocation6]
    $region33: #{tpu_custom_call.1} parent=1 // pred_fallthru
      _
    // Predicated region
    $region34: #{tpu_custom_call.1} parent=1 // pred_check
      _
    $region35: #{tpu_custom_call.1} parent=1 // pred_check_branch
      %760 = sbr.rel (0) target = $region37
    $region36: #{tpu_custom_call.1} parent=1 // pred_region
      %761 = dma.done [#allocation6], 16
    $region37: #{tpu_custom_call.1} parent=1 // pred_fallthru
      _
    %762 = vsyncpa [#allocation6], 1

</llo_original>
